<compile_context>
chip_gen: v7x
topology: tpu7x:2x2x1
jax: 0.10.0
libtpu: 0.0.40
codegen_flags: <defaults>
</compile_context>

<pallas_src>
import functools

import jax
import jax.numpy as jnp
from jax import lax
from jax.experimental import pallas as pl
from jax.experimental.pallas import tpu as pltpu

LANE = 128  # lane (last-dim) granularity


def _round_up(n, m):
    return ((n + m - 1) // m) * m


def _pad2d(x, rows, cols):
    r, c = x.shape
    return jnp.pad(x, ((0, rows - r), (0, cols - c)))


def _pick_tile(n_pad, requested):
    """Largest multiple of LANE that divides n_pad and is <= requested."""
    t = max(LANE, min(requested, n_pad))
    t = (t // LANE) * LANE
    while n_pad % t:
        t -= LANE
    return t


def _vmem_limit(est_bytes):
    """Scoped-VMEM budget: default unless the estimated footprint needs more.

    Capped at 60 MiB so it stays within v7x's 64 MiB physical VMEM per TC.
    """
    default = 32 * 1024 * 1024
    if est_bytes <= default // 2:
        return None  # default scoped limit is plenty
    return min(int(est_bytes) * 2, 60 * 1024 * 1024)


# ----------------------------------------------------------------------------
# Pallas kernels
# ----------------------------------------------------------------------------
def _transform_kernel(x_ref, w_ref, o_ref):
    """H = X @ W  (first layer's feature transform; bf16 in/out, f32 acc)."""
    o_ref[...] = jnp.dot(
        x_ref[...], w_ref[...], preferred_element_type=jnp.float32
    ).astype(o_ref.dtype)


def _agg_transform_kernel(a_ref, h_ref, b_ref, wn_ref, o_ref, acc_ref, *, tk):
    """acc[i] = sum_k Â[i,k] @ H[k]; epilogue: relu(acc + b) @ W_next -> bf16.

    H (h_ref) is the full (n_pad, F) activation resident in VMEM; the k-chunk
    is sliced in-kernel, so H is fetched from HBM exactly once.
    """
    k = pl.program_id(1)

    @pl.when(k == 0)
    def _():
        acc_ref[...] = jnp.zeros_like(acc_ref)

    koff = pl.multiple_of(k * tk, tk)
    acc_ref[...] += jnp.dot(
        a_ref[...], h_ref[pl.ds(koff, tk), :], preferred_element_type=jnp.float32
    )

    @pl.when(k == pl.num_programs(1) - 1)
    def _():
        z = jnp.maximum(acc_ref[...] + b_ref[...], 0.0)  # bias + ReLU in f32
        # TODO(synk): dropout training-mode masking would go here (eval: identity).
        o_ref[...] = jnp.dot(
            z.astype(jnp.bfloat16), wn_ref[...], preferred_element_type=jnp.float32
        ).astype(o_ref.dtype)


def _agg_head_kernel(a_ref, h_ref, b_ref, wh_ref, bh_ref, o_ref, acc_ref, *,
                     tk, num_valid, log_softmax):
    """Last GCN layer (Â@H + b, no ReLU) fused with the linear head
    (+ masked log_softmax over the valid class columns)."""
    k = pl.program_id(1)

    @pl.when(k == 0)
    def _():
        acc_ref[...] = jnp.zeros_like(acc_ref)

    koff = pl.multiple_of(k * tk, tk)
    acc_ref[...] += jnp.dot(
        a_ref[...], h_ref[pl.ds(koff, tk), :], preferred_element_type=jnp.float32
    )

    @pl.when(k == pl.num_programs(1) - 1)
    def _():
        z = acc_ref[...] + b_ref[...]                       # last GCN layer output
        logits = jnp.dot(
            z.astype(jnp.bfloat16), wh_ref[...], preferred_element_type=jnp.float32
        ) + bh_ref[...]
        if log_softmax:
            # mask padded class columns so softmax only covers real classes
            col = lax.broadcasted_iota(jnp.int32, logits.shape, 1)
            logits = jnp.where(col < num_valid, logits, -1e30)
            m = jnp.max(logits, axis=-1, keepdims=True)
            s = logits - m
            lse = jnp.log(jnp.sum(jnp.exp(s), axis=-1, keepdims=True))
            logits = s - lse
        o_ref[...] = logits.astype(o_ref.dtype)


# ----------------------------------------------------------------------------
# pallas_call wrappers
# ----------------------------------------------------------------------------
def feature_transform(x, w, *, tm):
    """H = X @ W, row-tiled, W resident across the grid, bf16 output."""
    n_pad, f_in = x.shape
    f_out = w.shape[1]
    tm = _pick_tile(n_pad, tm)
    return pl.pallas_call(
        _transform_kernel,
        out_shape=jax.ShapeDtypeStruct((n_pad, f_out), jnp.bfloat16),
        grid_spec=pltpu.PrefetchScalarGridSpec(
            num_scalar_prefetch=0,
            grid=(n_pad // tm,),
            in_specs=[
                pl.BlockSpec((tm, f_in), lambda i: (i, 0)),
                pl.BlockSpec((f_in, f_out), lambda i: (0, 0)),   # W resident
            ],
            out_specs=pl.BlockSpec((tm, f_out), lambda i: (i, 0)),
        ),
        compiler_params=pltpu.CompilerParams(
            dimension_semantics=("parallel",)
        ),
    )(x, w)


def gcn_agg_relu_transform(a_hat, h, b, w_next, *, tm, tk):
    """Tiled Â @ H + b, ReLU, then (fused) @ W_next. bf16 output."""
    n_pad = a_hat.shape[0]
    f_out = h.shape[1]
    f_next = w_next.shape[1]
    tm = _pick_tile(n_pad, tm)
    tk = _pick_tile(n_pad, tk)
    est = (2 * tm * tk * 2            # Â tile, double-buffered, bf16
           + 2 * n_pad * f_out * 2    # resident H, bf16
           + 2 * f_out * f_next * 2   # resident W_next, bf16
           + 2 * tm * f_next * 2      # output tile, bf16
           + tm * f_out * 4           # f32 accumulator
           + 2 * f_out * 4)           # bias
    return pl.pallas_call(
        functools.partial(_agg_transform_kernel, tk=tk),
        out_shape=jax.ShapeDtypeStruct((n_pad, f_next), jnp.bfloat16),
        grid_spec=pltpu.PrefetchScalarGridSpec(
            num_scalar_prefetch=0,
            grid=(n_pad // tm, n_pad // tk),
            in_specs=[
                pl.BlockSpec((tm, tk), lambda i, k: (i, k)),
                pl.BlockSpec((n_pad, f_out), lambda i, k: (0, 0)),    # H resident
                pl.BlockSpec((1, f_out), lambda i, k: (0, 0)),        # bias
                pl.BlockSpec((f_out, f_next), lambda i, k: (0, 0)),   # next-layer W
            ],
            out_specs=pl.BlockSpec((tm, f_next), lambda i, k: (i, 0)),
            scratch_shapes=[pltpu.VMEM((tm, f_out), jnp.float32)],
        ),
        compiler_params=pltpu.CompilerParams(
            dimension_semantics=("parallel", "arbitrary"),
            vmem_limit_bytes=_vmem_limit(est),
        ),
    )(a_hat, h, b, w_next)


def gcn_agg_head(a_hat, h, b, wh, bh, *, num_valid, log_softmax, tm, tk):
    """Last GCN layer (Â @ H + b) fused with linear head (+log_softmax)."""
    n_pad = a_hat.shape[0]
    f_out = h.shape[1]
    c_out = wh.shape[1]
    tm = _pick_tile(n_pad, tm)
    tk = _pick_tile(n_pad, tk)
    est = (2 * tm * tk * 2
           + 2 * n_pad * f_out * 2
           + 2 * f_out * c_out * 2
           + 2 * tm * c_out * 4
           + tm * f_out * 4
           + 2 * (f_out + c_out) * 4)
    return pl.pallas_call(
        functools.partial(_agg_head_kernel, tk=tk,
                          num_valid=num_valid, log_softmax=log_softmax),
        out_shape=jax.ShapeDtypeStruct((n_pad, c_out), jnp.float32),
        grid_spec=pltpu.PrefetchScalarGridSpec(
            num_scalar_prefetch=0,
            grid=(n_pad // tm, n_pad // tk),
            in_specs=[
                pl.BlockSpec((tm, tk), lambda i, k: (i, k)),
                pl.BlockSpec((n_pad, f_out), lambda i, k: (0, 0)),   # H resident
                pl.BlockSpec((1, f_out), lambda i, k: (0, 0)),       # layer bias
                pl.BlockSpec((f_out, c_out), lambda i, k: (0, 0)),   # head W
                pl.BlockSpec((1, c_out), lambda i, k: (0, 0)),       # head b
            ],
            out_specs=pl.BlockSpec((tm, c_out), lambda i, k: (i, 0)),
            scratch_shapes=[pltpu.VMEM((tm, f_out), jnp.float32)],
        ),
        compiler_params=pltpu.CompilerParams(
            dimension_semantics=("parallel", "arbitrary"),
            vmem_limit_bytes=_vmem_limit(est),
        ),
    )(a_hat, h, b, wh, bh)


# ----------------------------------------------------------------------------
# Plain-JAX glue: normalized adjacency from edge_index
# ----------------------------------------------------------------------------
def normalized_adjacency(edge_index, num_nodes, num_nodes_pad):
    """Â = D^{-1/2}(A + I)D^{-1/2}, zero-padded to (Np, Np), bf16.

    Self-loops use fill_value=1 (A[i,i]=1 regardless of pre-existing self
    edges), matching standard PyG gcn_norm behaviour.
    """
    src, dst = edge_index[0], edge_index[1]
    a = jnp.zeros((num_nodes, num_nodes), jnp.float32)
    a = a.at[dst, src].set(1.0)
    a = a.at[src, dst].set(1.0)                          # symmetrize
    idx = jnp.arange(num_nodes)
    a = a.at[idx, idx].set(1.0)                          # self loops (fill=1)
    deg = jnp.sum(a, axis=1)
    d_inv_sqrt = 1.0 / jnp.sqrt(jnp.maximum(deg, 1e-12))
    a = a * d_inv_sqrt[:, None] * d_inv_sqrt[None, :]
    # Zero padding: padded rows/cols of Â contribute nothing to valid rows.
    a = _pad2d(a, num_nodes_pad, num_nodes_pad)
    return a.astype(jnp.bfloat16)


# ----------------------------------------------------------------------------
# Model
# ----------------------------------------------------------------------------
class BaseGNNPallas:
    """JAX/Pallas re-implementation of BaseGNN forward (GCN layers, eval mode)."""

    def __init__(self, input_dim, hidden_dim, output_dim, num_layers=2,
                 task="classification", num_classes=None, dropout=0.5, *,
                 key, tm=512, tk=512):
        if task == "classification":
            if num_classes is None:
                raise ValueError("num_classes must be specified for classification")
        elif task != "regression":
            raise ValueError("Task must be either 'classification' or 'regression'")
        if num_layers < 1:
            raise ValueError("num_layers must be >= 1")
        self.task = task
        self.num_layers = num_layers
        self.dropout = dropout            # eval-mode: identity
        self.tm, self.tk = tm, tk
        self.input_dim_pad = _round_up(input_dim, LANE)

        # Layer dims exactly as the PyTorch module constructs them.
        layer_dims = [(input_dim, hidden_dim)]
        for _ in range(num_layers - 2):
            layer_dims.append((hidden_dim, hidden_dim))
        if num_layers > 1:
            layer_dims.append((hidden_dim, output_dim))
        self.layer_dims = layer_dims

        head_in = output_dim
        head_out = num_classes if task == "classification" else output_dim
        self.head_out = head_out

        keys = jax.random.split(key, len(layer_dims) + 1)
        self.weights, self.biases = [], []
        for k, (din, dout) in zip(keys[:-1], layer_dims):
            kw, kb = jax.random.split(k)
            scale = 1.0 / jnp.sqrt(jnp.float32(din))
            w = jax.random.uniform(kw, (din, dout), jnp.float32, -scale, scale)
            b = jax.random.uniform(kb, (1, dout), jnp.float32, -scale, scale)
            # lane-padded (zero padding) so kernel outputs are lane-dense;
            # weights bf16 (full-rate MXU), biases f32 (added on the f32 acc).
            w_pad = _pad2d(w, _round_up(din, LANE), _round_up(dout, LANE))
            self.weights.append(w_pad.astype(jnp.bfloat16))
            self.biases.append(_pad2d(b, 1, _round_up(dout, LANE)))

        kw, kb = jax.random.split(keys[-1])
        scale = 1.0 / jnp.sqrt(jnp.float32(head_in))
        hw = jax.random.uniform(kw, (head_in, head_out), jnp.float32, -scale, scale)
        hb = jax.random.uniform(kb, (1, head_out), jnp.float32, -scale, scale)
        self.head_w = _pad2d(
            hw, _round_up(head_in, LANE), _round_up(head_out, LANE)
        ).astype(jnp.bfloat16)
        self.head_b = _pad2d(hb, 1, _round_up(head_out, LANE))

    def precompute_adjacency(self, edge_index, num_nodes):
        """Â only depends on the graph; compute once and reuse across forwards."""
        n_pad = _round_up(num_nodes, LANE)
        return normalized_adjacency(edge_index, num_nodes, n_pad)

    def __call__(self, x, edge_index, a_hat=None):
        n = x.shape[0]
        n_pad = _round_up(n, LANE)
        if a_hat is None:
            a_hat = self.precompute_adjacency(edge_index, n)

        x = _pad2d(x.astype(jnp.bfloat16), n_pad, self.input_dim_pad)

        # first layer feature transform (only standalone X @ W kernel)
        h = feature_transform(x, self.weights[0], tm=self.tm)          # bf16

        # hidden layers: Â-aggregate + bias + ReLU fused with the NEXT layer's
        # feature transform (dropout is identity in eval mode)
        for i in range(self.num_layers - 1):
            h = gcn_agg_relu_transform(a_hat, h, self.biases[i],
                                       self.weights[i + 1],
                                       tm=self.tm, tk=self.tk)          # bf16

        # last GCN layer fused with classifier/regressor head
        out_pad = gcn_agg_head(
            a_hat, h, self.biases[-1], self.head_w, self.head_b,
            num_valid=self.head_out,
            log_softmax=(self.task == "classification"),
            tm=self.tm, tk=self.tk)
        # Padded rows/cols are artifacts of padding; they MUST be sliced off.
        return out_pad[:n, :self.head_out]


# ----------------------------------------------------------------------------
# Pure-JAX reference (same padded bf16 params) for a sanity check
# ----------------------------------------------------------------------------
def _reference_forward(model, x, a_hat, n):
    a = a_hat.astype(jnp.float32)
    n_pad = a.shape[0]
    h = _pad2d(x.astype(jnp.float32), n_pad, model.input_dim_pad)
    for i in range(model.num_layers - 1):
        h = a @ (h @ model.weights[i].astype(jnp.float32)) + model.biases[i]
        h = jnp.maximum(h, 0.0)
    h = a @ (h @ model.weights[-1].astype(jnp.float32)) + model.biases[-1]
    logits = h @ model.head_w.astype(jnp.float32) + model.head_b
    logits = logits[:n, :model.head_out]
    if model.task == "classification":
        return jax.nn.log_softmax(logits, axis=-1)
    return logits


# ----------------------------------------------------------------------------
# Demo
# ----------------------------------------------------------------------------
if __name__ == "__main__":
    key = jax.random.PRNGKey(0)
    k_x, k_e, k_p = jax.random.split(key, 3)

    N, E = 16, 40
    input_dim, hidden_dim, output_dim, num_classes = 8, 32, 16, 4

    x = jax.random.normal(k_x, (N, input_dim), jnp.float32)
    edge_index = jax.random.randint(k_e, (2, E), 0, N, jnp.int32)

    model = BaseGNNPallas(input_dim, hidden_dim, output_dim, num_layers=2,
                          task="classification", num_classes=num_classes,
                          dropout=0.5, key=k_p)

    a_hat = model.precompute_adjacency(edge_index, N)
    out = model(x, edge_index, a_hat=a_hat)
    out = jax.block_until_ready(out)

    assert out.shape == (N, num_classes)
    # log_softmax rows should sum (in prob space) to ~1 and be finite
    assert jnp.allclose(jnp.sum(jnp.exp(out), axis=-1), 1.0, atol=1e-3)
    assert jnp.all(jnp.isfinite(out))
    # loose check against a pure-JAX reference (bf16 intermediates in kernel)
    ref = jax.block_until_ready(_reference_forward(model, x, a_hat, N))
    assert jnp.max(jnp.abs(out - ref)) < 0.2, jnp.max(jnp.abs(out - ref))
    print("KERNEL_OK")
</pallas_src>

<mosaic_0001>
module attributes {stable_mosaic.version = 11 : i64} {
  func.func @_transform_kernel(%arg0: i32, %arg1: memref<128x128xbf16, #tpu.memory_space<vmem>>, %arg2: memref<128x128xbf16, #tpu.memory_space<vmem>>, %arg3: memref<128x128xbf16, #tpu.memory_space<vmem>>) attributes {dimension_semantics = [#tpu.dimension_semantics<parallel>], iteration_bounds = array<i64: 1>, scalar_prefetch = 0 : i64, scratch_operands = 0 : i64, tpu.core_type = #tpu.core_type<tc>, window_params = [{transform_indices = @transform_0, window_bounds = array<i64: 128, 128>}, {pipeline_mode = #tpu.pipeline_mode<synchronous>, transform_indices = @transform_1, window_bounds = array<i64: 128, 128>}, {transform_indices = @transform_2, window_bounds = array<i64: 128, 128>}]} {
    %c0 = arith.constant 0 : index
    %c0_0 = arith.constant 0 : index
    %0 = vector.load %arg1[%c0, %c0_0] : memref<128x128xbf16, #tpu.memory_space<vmem>>, vector<128x128xbf16>
    %c0_1 = arith.constant 0 : index
    %c0_2 = arith.constant 0 : index
    %1 = vector.load %arg2[%c0_1, %c0_2] : memref<128x128xbf16, #tpu.memory_space<vmem>>, vector<128x128xbf16>
    %cst = arith.constant dense<0.000000e+00> : vector<128x128xf32>
    %2 = tpu.matmul %0, %1, %cst {dimension_numbers = #tpu.dot_dimension_numbers<[1], [0], [0], [1], [0, 0, 1, 1], [], []>} : vector<128x128xbf16>, vector<128x128xbf16>, vector<128x128xf32> -> vector<128x128xf32>
    %3 = arith.truncf %2 : vector<128x128xf32> to vector<128x128xbf16>
    %c0_3 = arith.constant 0 : index
    %c0_4 = arith.constant 0 : index
    %4 = vector.load %arg3[%c0_3, %c0_4] : memref<128x128xbf16, #tpu.memory_space<vmem>>, vector<128x128xbf16>
    tpu.vector_store %arg3[%c0_3, %c0_4], %3 {strides = array<i32>} : memref<128x128xbf16, #tpu.memory_space<vmem>>, vector<128x128xbf16>,
    return
  }
  func.func @transform_0(%arg0: i32) -> (i32, i32) {
    %c0_i32 = arith.constant 0 : i32
    %c0_i32_0 = arith.constant 0 : i32
    return %arg0, %c0_i32 : i32, i32
  }
  func.func @transform_1(%arg0: i32) -> (i32, i32) {
    %c0_i32 = arith.constant 0 : i32
    %c0_i32_0 = arith.constant 0 : i32
    %c0_i32_1 = arith.constant 0 : i32
    return %c0_i32, %c0_i32_0 : i32, i32
  }
  func.func @transform_2(%arg0: i32) -> (i32, i32) {
    %c0_i32 = arith.constant 0 : i32
    %c0_i32_0 = arith.constant 0 : i32
    return %arg0, %c0_i32 : i32, i32
  }
}

</mosaic_0001>

<llo_original>
// kernel: tpu_custom_call.1
$region0: #{tpu_custom_call.1}
  #allocation0 [shape = 'u32[]', space=smem, size = 0x4, offset = 0x4, fixed_abs, tag = 'smem constant byte address 0x4 - core index']
  #allocation1 [shape = 'u32[144,128]{1,0:T(1,128)}', space=vmem, size = 0x12000, scoped, tag = 'internal scratch']
  %s0 = inlined_call_operand.hbm [shape: bf16[128,128], index: 0, kind: input, shape index: {}]
  %s1 = inlined_call_operand.hbm [shape: bf16[128,128], index: 1, kind: input, shape index: {}]
  %s2 = inlined_call_operand.hbm [shape: bf16[128,128], index: 2, kind: output, shape index: {}]
  %s3 = sld [smem:[#allocation0]]
  $region26: #{tpu_custom_call.1} parent=0
    _
  %s5 = ssub.s32 1, %s3
  %s6 = scalar_select 0, %s5, %s3
  $region1: #{tpu_custom_call.1} parent=0
    #allocation2 [shape = 'u8[32768]{0}', space=vmem, size = 0x8000, scoped, tag = 'input window, operand 0, single buffered']
    #allocation3 [shape = 's32[1]{0}', space=sflag, size = 0x4, scoped, tag = 'scoped memory for tpu_custom_call.1']
    #allocation4 [shape = 's32[1]{0}', space=sflag, size = 0x4, scoped, tag = 'scoped memory for tpu_custom_call.1']
    #allocation5 [shape = 'u8[32768]{0}', space=vmem, size = 0x8000, scoped, tag = 'input window, operand 1, single buffered']
    #allocation6 [shape = 's32[1]{0}', space=sflag, size = 0x4, scoped, tag = 'scoped memory for tpu_custom_call.1']
    #allocation7 [shape = 'u8[32768]{0}', space=vmem, size = 0x8000, scoped, tag = 'output window, operand 0, single buffered']
    %7 = vsyncpa [#allocation3], 0
    %8 = vsyncpa [#allocation6], 0
    %9 = vsyncpa [#allocation4], 0
    // Predicated region
    $region2: #{tpu_custom_call.1} parent=1 // pred_check
      _
    $region3: #{tpu_custom_call.1} parent=1 // pred_check_branch
      %11 = sbr.rel (0) target = $region5
    $region4: #{tpu_custom_call.1} parent=1 // pred_region
      %s13 = ssub.s32 1024, 1024
      %14 = vsyncadd [#allocation3], %s13
      %s15 = sshll.u32 [#allocation2], 4
      %s16 = int_to_ptr.vmem [resolvable:$true] %s15
      %21 = dma.hbm_to_vmem [thread:$0]  %s0, 1024, %s16, [#allocation3], 64, 64, 4
    $region5: #{tpu_custom_call.1} parent=1 // pred_fallthru
      _
    // Predicated region
    $region6: #{tpu_custom_call.1} parent=1 // pred_check
      _
    $region7: #{tpu_custom_call.1} parent=1 // pred_check_branch
      %23 = sbr.rel (0) target = $region9
    $region8: #{tpu_custom_call.1} parent=1 // pred_region
      %s25 = ssub.s32 1024, 1024
      %26 = vsyncadd [#allocation6], %s25
      %s27 = sshll.u32 [#allocation5], 4
      %s28 = int_to_ptr.vmem [resolvable:$true] %s27
      %33 = dma.hbm_to_vmem [thread:$0]  %s1, 1024, %s28, [#allocation6], 64, 64, 4
    $region9: #{tpu_custom_call.1} parent=1 // pred_fallthru
      _
    // Predicated region
    $region10: #{tpu_custom_call.1} parent=1 // pred_check
      _
    $region11: #{tpu_custom_call.1} parent=1 // pred_check_branch
      %35 = sbr.rel (0) target = $region13
    $region12: #{tpu_custom_call.1} parent=1 // pred_region
      %36 = dma.done [#allocation3], 1024
    $region13: #{tpu_custom_call.1} parent=1 // pred_fallthru
      _
    // Predicated region
    $region14: #{tpu_custom_call.1} parent=1 // pred_check
      _
    $region15: #{tpu_custom_call.1} parent=1 // pred_check_branch
      %38 = sbr.rel (0) target = $region17
    $region16: #{tpu_custom_call.1} parent=1 // pred_region
      %39 = dma.done [#allocation6], 1024
    $region17: #{tpu_custom_call.1} parent=1 // pred_fallthru
      _
    %v41 = vld [vmem:[#allocation2] sm:$0xf]
    %v42 = vld [vmem:[#allocation2 + $0x4] sm:$0xf]
    %v43 = vld [vmem:[#allocation2 + $0x8] sm:$0xf]
    %v44 = vld [vmem:[#allocation2 + $0xc] sm:$0xf]
    %v45 = vld [vmem:[#allocation2 + $0x10] sm:$0xf]
    %v46 = vld [vmem:[#allocation2 + $0x14] sm:$0xf]
    %v47 = vld [vmem:[#allocation2 + $0x18] sm:$0xf]
    %v48 = vld [vmem:[#allocation2 + $0x1c] sm:$0xf]
    %v49 = vld [vmem:[#allocation2 + $0x20] sm:$0xf]
    %v50 = vld [vmem:[#allocation2 + $0x24] sm:$0xf]
    %v51 = vld [vmem:[#allocation2 + $0x28] sm:$0xf]
    %v52 = vld [vmem:[#allocation2 + $0x2c] sm:$0xf]
    %v53 = vld [vmem:[#allocation2 + $0x30] sm:$0xf]
    %v54 = vld [vmem:[#allocation2 + $0x34] sm:$0xf]
    %v55 = vld [vmem:[#allocation2 + $0x38] sm:$0xf]
    %v56 = vld [vmem:[#allocation2 + $0x3c] sm:$0xf]
    %v57 = vld [vmem:[#allocation5] sm:$0xf]
    %v58 = vld [vmem:[#allocation5 + $0x4] sm:$0xf]
    %v59 = vld [vmem:[#allocation5 + $0x8] sm:$0xf]
    %v60 = vld [vmem:[#allocation5 + $0xc] sm:$0xf]
    %v61 = vld [vmem:[#allocation5 + $0x10] sm:$0xf]
    %v62 = vld [vmem:[#allocation5 + $0x14] sm:$0xf]
    %v63 = vld [vmem:[#allocation5 + $0x18] sm:$0xf]
    %v64 = vld [vmem:[#allocation5 + $0x1c] sm:$0xf]
    %v65 = vld [vmem:[#allocation5 + $0x20] sm:$0xf]
    %v66 = vld [vmem:[#allocation5 + $0x24] sm:$0xf]
    %v67 = vld [vmem:[#allocation5 + $0x28] sm:$0xf]
    %v68 = vld [vmem:[#allocation5 + $0x2c] sm:$0xf]
    %v69 = vld [vmem:[#allocation5 + $0x30] sm:$0xf]
    %v70 = vld [vmem:[#allocation5 + $0x34] sm:$0xf]
    %v71 = vld [vmem:[#allocation5 + $0x38] sm:$0xf]
    %v72 = vld [vmem:[#allocation5 + $0x3c] sm:$0xf]
    %v89 = vunpack.c.l.b16 %v41
    %v90 = vunpack.c.l.b16 %v42
    %v91 = vunpack.c.l.b16 %v43
    %v92 = vunpack.c.l.b16 %v44
    %v93 = vunpack.c.l.b16 %v45
    %v94 = vunpack.c.l.b16 %v46
    %v95 = vunpack.c.l.b16 %v47
    %v96 = vunpack.c.l.b16 %v48
    %v97 = vunpack.c.l.b16 %v49
    %v98 = vunpack.c.l.b16 %v50
    %v99 = vunpack.c.l.b16 %v51
    %v100 = vunpack.c.l.b16 %v52
    %v101 = vunpack.c.l.b16 %v53
    %v102 = vunpack.c.l.b16 %v54
    %v103 = vunpack.c.l.b16 %v55
    %v104 = vunpack.c.l.b16 %v56
    %v105 = vpack.c.b16 %v90, %v89
    %v106 = vpack.c.b16 %v92, %v91
    %v107 = vpack.c.b16 %v94, %v93
    %v108 = vpack.c.b16 %v96, %v95
    %v109 = vpack.c.b16 %v98, %v97
    %v110 = vpack.c.b16 %v100, %v99
    %v111 = vpack.c.b16 %v102, %v101
    %v112 = vpack.c.b16 %v104, %v103
    %v137 = vunpack.c.l.b16 %v57
    %v138 = vunpack.c.l.b16 %v58
    %v139 = vunpack.c.l.b16 %v59
    %v140 = vunpack.c.l.b16 %v60
    %v141 = vunpack.c.l.b16 %v61
    %v142 = vunpack.c.l.b16 %v62
    %v143 = vunpack.c.l.b16 %v63
    %v144 = vunpack.c.l.b16 %v64
    %v145 = vunpack.c.l.b16 %v65
    %v146 = vunpack.c.l.b16 %v66
    %v147 = vunpack.c.l.b16 %v67
    %v148 = vunpack.c.l.b16 %v68
    %v149 = vunpack.c.l.b16 %v69
    %v150 = vunpack.c.l.b16 %v70
    %v151 = vunpack.c.l.b16 %v71
    %v152 = vunpack.c.l.b16 %v72
    %v153 = vpack.c.b16 %v138, %v137
    %v154 = vpack.c.b16 %v140, %v139
    %v155 = vpack.c.b16 %v142, %v141
    %v156 = vpack.c.b16 %v144, %v143
    %v157 = vpack.c.b16 %v146, %v145
    %v158 = vpack.c.b16 %v148, %v147
    %v159 = vpack.c.b16 %v150, %v149
    %v160 = vpack.c.b16 %v152, %v151
    %169 = vmatprep.subr.bf16.mxu0 0
    %170 = vmatpush1.bf16.msra.mxu0 %v153
    %171 = vmatprep.subr.bf16.mxu0 0
    %172 = vmatpush1.bf16.msra.mxu0 %v154
    %173 = vmatprep.subr.bf16.mxu0 0
    %174 = vmatpush1.bf16.msra.mxu0 %v155
    %175 = vmatprep.subr.bf16.mxu0 0
    %176 = vmatpush1.bf16.msra.mxu0 %v156
    %177 = vmatprep.subr.bf16.mxu0 0
    %178 = vmatpush1.bf16.msra.mxu0 %v157
    %179 = vmatprep.subr.bf16.mxu0 0
    %180 = vmatpush1.bf16.msra.mxu0 %v158
    %181 = vmatprep.subr.bf16.mxu0 0
    %182 = vmatpush1.bf16.msra.mxu0 %v159
    %183 = vmatprep.subr.bf16.mxu0 0
    %184 = vmatpush1.bf16.msra.mxu0 %v160
    %185 = vmatprep.subr.bf16.mxu0 0
    %186 = vmatpush1.bf16.msra.mxu0 0
    %187 = vmatprep.subr.bf16.mxu0 0
    %188 = vmatpush1.bf16.msra.mxu0 0
    %189 = vmatprep.subr.bf16.mxu0 0
    %190 = vmatpush1.bf16.msra.mxu0 0
    %191 = vmatprep.subr.bf16.mxu0 0
    %192 = vmatpush1.bf16.msra.mxu0 0
    %193 = vmatprep.subr.bf16.mxu0 0
    %194 = vmatpush1.bf16.msra.mxu0 0
    %195 = vmatprep.subr.bf16.mxu0 0
    %196 = vmatpush1.bf16.msra.mxu0 0
    %197 = vmatprep.subr.bf16.mxu0 0
    %198 = vmatpush1.bf16.msra.mxu0 0
    %199 = vmatprep.subr.bf16.mxu0 0
    %200 = vmatpush1.bf16.msra.mxu0 0
    %201 = vmatprep.mubr.bf16.mxu0 0
    %202 = vmatmul.mubr.bf16.gmra.mrb[0].mxu0 %v105
    %v203 = vpop.f32.mrb[0].mxu0
    %v204 = vadd.f32 0.0, %v203
    %v205 = vpop.f32.mrb[0].mxu0
    %v206 = vpop.f32.mrb[0].mxu0
    %v207 = vadd.f32 0.0, %v206
    %v208 = vpop.f32.mrb[0].mxu0
    %209 = vmatprep.mubr.bf16.mxu0 0
    %210 = vmatmul.mubr.bf16.gmra.mrb[0].mxu0 %v106
    %v211 = vpop.f32.mrb[0].mxu0
    %v212 = vadd.f32 0.0, %v211
    %v213 = vpop.f32.mrb[0].mxu0
    %v214 = vpop.f32.mrb[0].mxu0
    %v215 = vadd.f32 0.0, %v214
    %v216 = vpop.f32.mrb[0].mxu0
    %217 = vmatprep.mubr.bf16.mxu0 0
    %218 = vmatmul.mubr.bf16.gmra.mrb[0].mxu0 %v107
    %v219 = vpop.f32.mrb[0].mxu0
    %v220 = vadd.f32 0.0, %v219
    %v221 = vpop.f32.mrb[0].mxu0
    %v222 = vpop.f32.mrb[0].mxu0
    %v223 = vadd.f32 0.0, %v222
    %v224 = vpop.f32.mrb[0].mxu0
    %225 = vmatprep.mubr.bf16.mxu0 0
    %226 = vmatmul.mubr.bf16.gmra.mrb[0].mxu0 %v108
    %v227 = vpop.f32.mrb[0].mxu0
    %v228 = vadd.f32 0.0, %v227
    %v229 = vpop.f32.mrb[0].mxu0
    %v230 = vpop.f32.mrb[0].mxu0
    %v231 = vadd.f32 0.0, %v230
    %v232 = vpop.f32.mrb[0].mxu0
    %233 = vmatprep.mubr.bf16.mxu0 0
    %234 = vmatmul.mubr.bf16.gmra.mrb[0].mxu0 %v109
    %v235 = vpop.f32.mrb[0].mxu0
    %v236 = vadd.f32 0.0, %v235
    %v237 = vpop.f32.mrb[0].mxu0
    %v238 = vpop.f32.mrb[0].mxu0
    %v239 = vadd.f32 0.0, %v238
    %v240 = vpop.f32.mrb[0].mxu0
    %241 = vmatprep.mubr.bf16.mxu0 0
    %242 = vmatmul.mubr.bf16.gmra.mrb[0].mxu0 %v110
    %v243 = vpop.f32.mrb[0].mxu0
    %v244 = vadd.f32 0.0, %v243
    %v245 = vpop.f32.mrb[0].mxu0
    %v246 = vpop.f32.mrb[0].mxu0
    %v247 = vadd.f32 0.0, %v246
    %v248 = vpop.f32.mrb[0].mxu0
    %249 = vmatprep.mubr.bf16.mxu0 0
    %250 = vmatmul.mubr.bf16.gmra.mrb[0].mxu0 %v111
    %v251 = vpop.f32.mrb[0].mxu0
    %v252 = vadd.f32 0.0, %v251
    %v253 = vpop.f32.mrb[0].mxu0
    %v254 = vpop.f32.mrb[0].mxu0
    %v255 = vadd.f32 0.0, %v254
    %v256 = vpop.f32.mrb[0].mxu0
    %257 = vmatprep.mubr.bf16.mxu0 0
    %258 = vmatmul.mubr.bf16.gmra.mrb[0].mxu0 %v112
    %v259 = vpop.f32.mrb[0].mxu0
    %v260 = vadd.f32 0.0, %v259
    %v261 = vpop.f32.mrb[0].mxu0
    %v262 = vpop.f32.mrb[0].mxu0
    %v263 = vadd.f32 0.0, %v262
    %v264 = vpop.f32.mrb[0].mxu0
    %265 = vdwg.mxu0
    %v266 = vpack.c.bf16 %v207, %v204
    %v267 = vpack.c.bf16 %v215, %v212
    %v268 = vpack.c.bf16 %v223, %v220
    %v269 = vpack.c.bf16 %v231, %v228
    %v270 = vpack.c.bf16 %v239, %v236
    %v271 = vpack.c.bf16 %v247, %v244
    %v272 = vpack.c.bf16 %v255, %v252
    %v273 = vpack.c.bf16 %v263, %v260
    %v282 = vunpack.c.l.b16 %v266
    %v283 = vunpack.c.h.b16 %v266
    %v284 = vunpack.c.l.b16 %v267
    %v285 = vunpack.c.h.b16 %v267
    %v286 = vunpack.c.l.b16 %v268
    %v287 = vunpack.c.h.b16 %v268
    %v288 = vunpack.c.l.b16 %v269
    %v289 = vunpack.c.h.b16 %v269
    %v290 = vunpack.c.l.b16 %v270
    %v291 = vunpack.c.h.b16 %v270
    %v292 = vunpack.c.l.b16 %v271
    %v293 = vunpack.c.h.b16 %v271
    %v294 = vunpack.c.l.b16 %v272
    %v295 = vunpack.c.h.b16 %v272
    %v296 = vunpack.c.l.b16 %v273
    %v297 = vunpack.c.h.b16 %v273
    %v298 = vpack.c.b16 %v282, %v282
    %v299 = vpack.c.b16 %v283, %v283
    %v300 = vpack.c.b16 %v284, %v284
    %v301 = vpack.c.b16 %v285, %v285
    %v302 = vpack.c.b16 %v286, %v286
    %v303 = vpack.c.b16 %v287, %v287
    %v304 = vpack.c.b16 %v288, %v288
    %v305 = vpack.c.b16 %v289, %v289
    %v306 = vpack.c.b16 %v290, %v290
    %v307 = vpack.c.b16 %v291, %v291
    %v308 = vpack.c.b16 %v292, %v292
    %v309 = vpack.c.b16 %v293, %v293
    %v310 = vpack.c.b16 %v294, %v294
    %v311 = vpack.c.b16 %v295, %v295
    %v312 = vpack.c.b16 %v296, %v296
    %v313 = vpack.c.b16 %v297, %v297
    %330 = vst [vmem:[#allocation7] sm:$0xf] %v298
    %331 = vst [vmem:[#allocation7 + $0x4] sm:$0xf] %v299
    %332 = vst [vmem:[#allocation7 + $0x8] sm:$0xf] %v300
    %333 = vst [vmem:[#allocation7 + $0xc] sm:$0xf] %v301
    %334 = vst [vmem:[#allocation7 + $0x10] sm:$0xf] %v302
    %335 = vst [vmem:[#allocation7 + $0x14] sm:$0xf] %v303
    %336 = vst [vmem:[#allocation7 + $0x18] sm:$0xf] %v304
    %337 = vst [vmem:[#allocation7 + $0x1c] sm:$0xf] %v305
    %338 = vst [vmem:[#allocation7 + $0x20] sm:$0xf] %v306
    %339 = vst [vmem:[#allocation7 + $0x24] sm:$0xf] %v307
    %340 = vst [vmem:[#allocation7 + $0x28] sm:$0xf] %v308
    %341 = vst [vmem:[#allocation7 + $0x2c] sm:$0xf] %v309
    %342 = vst [vmem:[#allocation7 + $0x30] sm:$0xf] %v310
    %343 = vst [vmem:[#allocation7 + $0x34] sm:$0xf] %v311
    %344 = vst [vmem:[#allocation7 + $0x38] sm:$0xf] %v312
    %345 = vst [vmem:[#allocation7 + $0x3c] sm:$0xf] %v313
    // Predicated region
    $region18: #{tpu_custom_call.1} parent=1 // pred_check
      _
    $region19: #{tpu_custom_call.1} parent=1 // pred_check_branch
      %347 = sbr.rel (0) target = $region21
    $region20: #{tpu_custom_call.1} parent=1 // pred_region
      %s349 = ssub.s32 1024, 1024
      %350 = vsyncadd [#allocation4], %s349
      %s351 = sshll.u32 [#allocation7], 4
      %s352 = int_to_ptr.vmem [resolvable:$true] %s351
      %357 = dma.vmem_to_hbm [thread:$0]  %s352, 1024, %s2, [#allocation4], 64, 64, 4
    $region21: #{tpu_custom_call.1} parent=1 // pred_fallthru
      _
    // Predicated region
    $region22: #{tpu_custom_call.1} parent=1 // pred_check
      _
    $region23: #{tpu_custom_call.1} parent=1 // pred_check_branch
      %359 = sbr.rel (0) target = $region25
    $region24: #{tpu_custom_call.1} parent=1 // pred_region
      %360 = dma.done [#allocation4], 1024
    $region25: #{tpu_custom_call.1} parent=1 // pred_fallthru
      _
    %361 = vsyncpa [#allocation3], 1
    %362 = vsyncpa [#allocation6], 1
    %363 = vsyncpa [#allocation4], 1

</llo_original>
